<compile_context>
chip_gen: v6e
topology: v6e:2x2x1
jax: 0.10.0
libtpu: 0.0.40
codegen_flags: <defaults>
</compile_context>

<pallas_src>
import functools

import jax
import jax.numpy as jnp
import numpy as np
from jax import lax
from jax.experimental import pallas as pl
from jax.experimental.pallas import tpu as pltpu


def _scatter_matrix(n_rows, n_cols, col_of_row):
    """0/1 matrix with S[r, col_of_row(r)] = 1; rows mapping out of range are 0."""
    s = np.zeros((n_rows, n_cols), np.float32)
    for r in range(n_rows):
        c = col_of_row(r)
        if 0 <= c < n_cols:
            s[r, c] = 1.0
    return jnp.asarray(s)


def _convt_kernel(*refs, ks, dilation, padding, tile_l, l_conv, use_halo):
    """One (batch-block, L-tile) grid step.

    Refs (in order):
      xa : (Bb*C_in, LB)            main input block of this tile
      xb : (Bb*C_in, LB)            previous block (only when use_halo)
      sa : (LB, TILE_L + E)         constant 0/1 scatter: compact -> upsampled
      sb : (LB, TILE_L + E)         halo scatter, nonzero only in last h_in rows
      w  : (ks, Bb*C_out, Bb*C_in)  per-tap block-diagonal transposed weights
      b  : (Bb*C_out, 1)            per-block bias
      o  : (Bb*C_out, TILE_L)       output tile (final layout, trim applied)
    """
    if use_halo:
        xa_ref, xb_ref, sa_ref, sb_ref, w_ref, b_ref, o_ref = refs
    else:
        xa_ref, sa_ref, w_ref, b_ref, o_ref = refs

    t = pl.program_id(1)

    # On-chip zero-upsample: z[:, c] holds the virtual upsampled input at conv
    # position q = padding + t*TILE_L - dilation*(ks-1) + c.
    z = jnp.dot(xa_ref[...], sa_ref[...], preferred_element_type=jnp.float32)
    if use_halo:
        z = z + jnp.dot(xb_ref[...], sb_ref[...],
                        preferred_element_type=jnp.float32)

    # Bias folded into the accumulator init, masked so the output_padding tail
    # (conv positions p >= l_conv) stays exactly zero.
    p = padding + t * tile_l + lax.broadcasted_iota(jnp.int32, (1, tile_l), 1)
    acc = b_ref[...] * (p < l_conv).astype(jnp.float32)

    # Tap accumulation with block-diagonal weights (batch block folded in).
    for j in range(ks):
        off = dilation * (ks - 1 - j)
        acc = acc + jnp.dot(w_ref[j], z[:, off:off + tile_l],
                            preferred_element_type=jnp.float32)

    o_ref[...] = acc


def _choose_tiling(n, c_in, c_out, ks, stride, e, target_lanes, batch_block,
                   vmem_budget):
    """Pick (batch block Bb, output tile lanes TILE_L) under a VMEM budget."""
    base = 128 * stride                      # keeps LB and TILE_L 128-aligned
    bb = max(1, min(n, batch_block))
    tl = max(base, (max(base, target_lanes) // base) * base)

    def est(bb_, tl_):
        lb = tl_ // stride
        tlh = tl_ + e
        r_in, r_out = bb_ * c_in, bb_ * c_out
        b = 0
        b += 2 * 2 * r_in * lb * 4           # two x streams, double buffered
        b += 2 * 2 * lb * tlh * 4            # two scatter matrices, double buffered
        b += 2 * r_out * tl_ * 4             # output block, double buffered
        b += 2 * ks * r_out * r_in * 4       # block-diag weights
        b += (r_in + r_out) * tlh * 4        # live z / acc values
        return b

    while tl > base and est(bb, tl) > vmem_budget:
        tl -= base
    while bb > 1 and est(bb, tl) > vmem_budget:
        bb -= 1
    return bb, tl


def chunked_conv_transpose1d(x, weight, bias=None, *, stride=1, padding=0,
                             output_padding=0, dilation=1, groups=1,
                             target_lanes=1024, batch_block=8):
    """Forward of ChunkedConvTranspose1d (groups=1). x: (N, C_in, L_in) float."""
    assert groups == 1, "only groups=1 is supported"
    n, c_in, l_in = x.shape
    w_cin, c_out, ks = weight.shape
    assert w_cin == c_in
    e = dilation * (ks - 1)
    l_conv = (l_in - 1) * stride + 1 + e
    l_final = l_conv + output_padding
    l_out = l_final - 2 * padding
    assert l_out > 0 and 2 * padding < l_final, "degenerate padding config"

    x = x.astype(jnp.float32)

    # ---- batch blocking (free HBM reshape) --------------------------------
    bb, tl = _choose_tiling(n, c_in, c_out, ks, stride, e,
                            target_lanes, batch_block,
                            vmem_budget=30 * 1024 * 1024)
    n_pad = -(-n // bb) * bb
    if n_pad != n:
        x = jnp.pad(x, ((0, n_pad - n), (0, 0), (0, 0)))
    nb = n_pad // bb
    r_in = bb * c_in
    r_out = bb * c_out
    xr = x.reshape(nb, r_in, l_in)

    # Block-diagonal per-tap weights: wbd[j, a*C_out+o, b*C_in+i] = d_ab W[i,o,j].
    w32 = weight.astype(jnp.float32)
    eye = jnp.eye(bb, dtype=jnp.float32)
    wbd = jnp.einsum("ab,ioj->jaobi", eye, w32).reshape(ks, r_out, r_in)
    if bias is None:
        bblk = jnp.zeros((r_out, 1), jnp.float32)
    else:
        bblk = jnp.tile(bias.astype(jnp.float32).reshape(-1), bb).reshape(r_out, 1)

    # ---- L tiling ----------------------------------------------------------
    if l_out <= tl:
        # Single output tile covering the whole (trimmed) output; no halo
        # stream and no second DMA of x.
        grid_l = 1
        tl_eff = l_out
        tlh = tl_eff + e
        lbx = l_in
        use_halo = False
        sa = _scatter_matrix(l_in, tlh, lambda i: i * stride - padding + e)
        sb = None
        xa = xr
        a_idx = lambda nn, ll: (nn, 0, 0)
        b_idx = None
    else:
        tl_eff = tl
        tlh = tl + e
        grid_l = pl.cdiv(l_out, tl)
        lb = tl // stride                        # input columns per tile body
        ib0 = -(-padding // stride)              # first body input index of tile 0
        h_in = ib0 - (-(-(padding - e) // stride))   # halo input count per tile
        assert 0 <= ib0 <= lb and 0 <= h_in <= lb and e <= tl, \
            "padding/dilation too large for this tile size"
        c0 = ib0 * stride - padding + e
        padl = lb - ib0
        # Pad x so tile t's body inputs are exactly padded block t+1 and its
        # halo is the tail of padded block t (block 0 is pure left padding).
        lp = max((grid_l + 1) * lb, -(-(padl + l_in) // lb) * lb)
        padr = lp - padl - l_in
        xa = jnp.pad(xr, ((0, 0), (0, 0), (padl, padr)))
        lbx = lb
        sa = _scatter_matrix(lb, tlh, lambda u: u * stride + c0)
        use_halo = h_in > 0
        sb = (_scatter_matrix(lb, tlh, lambda v: c0 - (lb - v) * stride)
              if use_halo else None)
        a_idx = lambda nn, ll: (nn, 0, ll + 1)
        b_idx = lambda nn, ll: (nn, 0, ll)

    kernel = functools.partial(
        _convt_kernel, ks=ks, dilation=dilation, padding=padding,
        tile_l=tl_eff, l_conv=l_conv, use_halo=use_halo)

    operands = [xa]
    in_specs = [pl.BlockSpec((None, r_in, lbx), a_idx)]
    if use_halo:
        operands.append(xa)
        in_specs.append(pl.BlockSpec((None, r_in, lbx), b_idx))
    operands.append(sa)
    in_specs.append(pl.BlockSpec(sa.shape, lambda nn, ll: (0, 0)))
    if use_halo:
        operands.append(sb)
        in_specs.append(pl.BlockSpec(sb.shape, lambda nn, ll: (0, 0)))
    operands += [wbd, bblk]
    in_specs += [pl.BlockSpec(wbd.shape, lambda nn, ll: (0, 0, 0)),
                 pl.BlockSpec(bblk.shape, lambda nn, ll: (0, 0))]

    out = pl.pallas_call(
        kernel,
        out_shape=jax.ShapeDtypeStruct((nb, r_out, l_out), jnp.float32),
        grid=(nb, grid_l),
        in_specs=in_specs,
        out_specs=pl.BlockSpec((None, r_out, tl_eff), lambda nn, ll: (nn, 0, ll)),
        compiler_params=pltpu.CompilerParams(
            dimension_semantics=("parallel", "parallel"),
            vmem_limit_bytes=48 * 1024 * 1024),
    )(*operands)

    out = out.reshape(n_pad, c_out, l_out)
    if n_pad != n:
        out = out[:n]
    return out


def _reference(x, weight, bias, *, stride, padding, output_padding, dilation):
    """Vectorized pure-JAX reference (zero-upsample + correlate with flipped taps)."""
    n, c_in, l_in = x.shape
    _, c_out, ks = weight.shape
    e = dilation * (ks - 1)
    l_conv = (l_in - 1) * stride + 1 + e
    l_up = (l_in - 1) * stride + 1
    x_up = jnp.zeros((n, c_in, l_up), jnp.float32).at[:, :, ::stride].set(x)
    x_pad = jnp.pad(x_up, ((0, 0), (0, 0), (e, e)))
    out = jnp.zeros((n, c_out, l_conv), jnp.float32)
    for j in range(ks):
        off = dilation * (ks - 1 - j)
        out = out + jnp.einsum("nci,cd->ndi",
                               x_pad[:, :, off:off + l_conv], weight[:, :, j])
    out = out + bias[None, :, None]
    if output_padding > 0:
        out = jnp.pad(out, ((0, 0), (0, 0), (0, output_padding)))
    if padding > 0:
        out = out[:, :, padding:-padding]
    return out


def _reference_loops(x, weight, bias, *, stride, padding, output_padding, dilation):
    """Brute-force scatter reference matching the PyTorch module (small shapes only)."""
    n, c_in, l_in = x.shape
    _, c_out, ks = weight.shape
    l_conv = (l_in - 1) * stride + 1 + dilation * (ks - 1)
    out = jnp.zeros((n, c_out, l_conv), jnp.float32)
    for i in range(l_in):
        for j in range(ks):
            p = i * stride + j * dilation
            out = out.at[:, :, p].add(
                jnp.einsum("nc,cd->nd", x[:, :, i], weight[:, :, j]))
    out = out + bias[None, :, None]
    if output_padding > 0:
        out = jnp.pad(out, ((0, 0), (0, 0), (0, output_padding)))
    if padding > 0:
        out = out[:, :, padding:-padding]
    return out


if __name__ == "__main__":
    key = jax.random.PRNGKey(0)

    def run_case(n, c_in, c_out, l_in, ks, stride, padding, out_pad, dilation,
                 case_key, check_loops=False):
        kx, kw, kb = jax.random.split(case_key, 3)
        x = jax.random.normal(kx, (n, c_in, l_in), jnp.float32)
        # ConvTranspose1d weight layout: (in_channels, out_channels // groups, kernel)
        w = 0.1 * jax.random.normal(kw, (c_in, c_out, ks), jnp.float32)
        b = 0.1 * jax.random.normal(kb, (c_out,), jnp.float32)

        out = chunked_conv_transpose1d(
            x, w, b, stride=stride, padding=padding,
            output_padding=out_pad, dilation=dilation)
        out = jax.block_until_ready(out)

        ref = _reference(x, w, b, stride=stride, padding=padding,
                         output_padding=out_pad, dilation=dilation)
        assert out.shape == ref.shape, (out.shape, ref.shape)
        assert jnp.allclose(out, ref, atol=1e-4, rtol=1e-4), float(
            jnp.max(jnp.abs(out - ref)))
        if check_loops:
            ref2 = _reference_loops(x, w, b, stride=stride, padding=padding,
                                    output_padding=out_pad, dilation=dilation)
            assert jnp.allclose(out, ref2, atol=1e-4, rtol=1e-4), float(
                jnp.max(jnp.abs(out - ref2)))
        return out

    k1, k2, k3, k4 = jax.random.split(key, 4)
    # Small config from the module spec (single output tile path, Bb=2).
    run_case(2, 4, 8, 16, 3, 2, 1, 1, 1, k1, check_loops=True)
    # Odd batch (Bb=3), ks=5, stride=1, single-tile path.
    run_case(3, 4, 8, 64, 5, 1, 2, 0, 1, k2, check_loops=True)
    # Long input: tiled grid with halo (2 L-tiles of 1024 lanes, stride 2).
    run_case(2, 4, 8, 1024, 3, 2, 1, 1, 1, k3)
    # Dilation 2, stride 1: tiled grid, halo of 4, ragged last output tile.
    run_case(2, 4, 8, 2000, 3, 1, 2, 0, 2, k4)
    print("KERNEL_OK")
</pallas_src>

<mosaic_0001>
module attributes {stable_mosaic.version = 11 : i64} {
  func.func @_convt_kernel(%arg0: i32, %arg1: i32, %arg2: memref<1x8x16xf32, #tpu.memory_space<vmem>>, %arg3: memref<16x34xf32, #tpu.memory_space<vmem>>, %arg4: memref<3x16x8xf32, #tpu.memory_space<vmem>>, %arg5: memref<16x1xf32, #tpu.memory_space<vmem>>, %arg6: memref<1x16x32xf32, #tpu.memory_space<vmem>>) attributes {dimension_semantics = [#tpu.dimension_semantics<parallel>, #tpu.dimension_semantics<parallel>], iteration_bounds = array<i64: 1, 1>, scalar_prefetch = 0 : i64, scratch_operands = 0 : i64, tpu.core_type = #tpu.core_type<tc>, window_params = [{transform_indices = @transform_0, window_bounds = array<i64: 1, 8, 16>}, {pipeline_mode = #tpu.pipeline_mode<synchronous>, transform_indices = @transform_1, window_bounds = array<i64: 16, 34>}, {pipeline_mode = #tpu.pipeline_mode<synchronous>, transform_indices = @transform_2, window_bounds = array<i64: 3, 16, 8>}, {pipeline_mode = #tpu.pipeline_mode<synchronous>, transform_indices = @transform_3, window_bounds = array<i64: 16, 1>}, {transform_indices = @transform_4, window_bounds = array<i64: 1, 16, 32>}]} {
    %c0 = arith.constant 0 : index
    %c0_0 = arith.constant 0 : index
    %c0_1 = arith.constant 0 : index
    %0 = vector.load %arg2[%c0, %c0_0, %c0_1] : memref<1x8x16xf32, #tpu.memory_space<vmem>>, vector<1x8x16xf32>
    %1 = vector.shape_cast %0 : vector<1x8x16xf32> to vector<8x16xf32>
    %c0_2 = arith.constant 0 : index
    %c0_3 = arith.constant 0 : index
    %2 = vector.load %arg3[%c0_2, %c0_3] : memref<16x34xf32, #tpu.memory_space<vmem>>, vector<16x34xf32>
    %cst = arith.constant dense<0.000000e+00> : vector<8x34xf32>
    %3 = tpu.matmul %1, %2, %cst {dimension_numbers = #tpu.dot_dimension_numbers<[1], [0], [0], [1], [0, 0, 1, 1], [], []>} : vector<8x16xf32>, vector<16x34xf32>, vector<8x34xf32> -> vector<8x34xf32>
    %c32_i32 = arith.constant 32 : i32
    %4 = arith.muli %arg1, %c32_i32 : i32
    %c1_i32 = arith.constant 1 : i32
    %5 = arith.addi %c1_i32, %4 : i32
    %6 = tpu.iota {dimensions = array<i32: 1>} : vector<1x32xi32>
    %7 = vector.broadcast %5 : i32 to vector<1x32xi32>
    %8 = arith.addi %7, %6 : vector<1x32xi32>
    %c0_4 = arith.constant 0 : index
    %c0_5 = arith.constant 0 : index
    %9 = vector.load %arg5[%c0_4, %c0_5] : memref<16x1xf32, #tpu.memory_space<vmem>>, vector<16x1xf32>
    %c33_i32 = arith.constant 33 : i32
    %10 = vector.broadcast %c33_i32 : i32 to vector<1x32xi32>
    %11 = arith.cmpi slt, %8, %10 : vector<1x32xi32>
    %12 = arith.extui %11 : vector<1x32xi1> to vector<1x32xi32>
    %13 = arith.sitofp %12 : vector<1x32xi32> to vector<1x32xf32>
    %14 = vector.broadcast %9 : vector<16x1xf32> to vector<16x32xf32>
    %15 = vector.broadcast %13 : vector<1x32xf32> to vector<16x32xf32>
    %16 = arith.mulf %14, %15 : vector<16x32xf32>
    %c0_6 = arith.constant 0 : index
    %c0_7 = arith.constant 0 : index
    %c0_8 = arith.constant 0 : index
    %17 = vector.load %arg4[%c0_6, %c0_7, %c0_8] : memref<3x16x8xf32, #tpu.memory_space<vmem>>, vector<1x16x8xf32>
    %18 = vector.shape_cast %17 : vector<1x16x8xf32> to vector<16x8xf32>
    %19 = vector.extract_strided_slice %3 {offsets = [0, 2], sizes = [8, 32], strides = [1, 1]} : vector<8x34xf32> to vector<8x32xf32>
    %cst_9 = arith.constant dense<0.000000e+00> : vector<16x32xf32>
    %20 = tpu.matmul %18, %19, %cst_9 {dimension_numbers = #tpu.dot_dimension_numbers<[1], [0], [0], [1], [0, 0, 1, 1], [], []>} : vector<16x8xf32>, vector<8x32xf32>, vector<16x32xf32> -> vector<16x32xf32>
    %21 = arith.addf %16, %20 : vector<16x32xf32>
    %c1 = arith.constant 1 : index
    %c0_10 = arith.constant 0 : index
    %c0_11 = arith.constant 0 : index
    %22 = vector.load %arg4[%c1, %c0_10, %c0_11] : memref<3x16x8xf32, #tpu.memory_space<vmem>>, vector<1x16x8xf32>
    %23 = vector.shape_cast %22 : vector<1x16x8xf32> to vector<16x8xf32>
    %24 = vector.extract_strided_slice %3 {offsets = [0, 1], sizes = [8, 32], strides = [1, 1]} : vector<8x34xf32> to vector<8x32xf32>
    %cst_12 = arith.constant dense<0.000000e+00> : vector<16x32xf32>
    %25 = tpu.matmul %23, %24, %cst_12 {dimension_numbers = #tpu.dot_dimension_numbers<[1], [0], [0], [1], [0, 0, 1, 1], [], []>} : vector<16x8xf32>, vector<8x32xf32>, vector<16x32xf32> -> vector<16x32xf32>
    %26 = arith.addf %21, %25 : vector<16x32xf32>
    %c2 = arith.constant 2 : index
    %c0_13 = arith.constant 0 : index
    %c0_14 = arith.constant 0 : index
    %27 = vector.load %arg4[%c2, %c0_13, %c0_14] : memref<3x16x8xf32, #tpu.memory_space<vmem>>, vector<1x16x8xf32>
    %28 = vector.shape_cast %27 : vector<1x16x8xf32> to vector<16x8xf32>
    %29 = vector.extract_strided_slice %3 {offsets = [0, 0], sizes = [8, 32], strides = [1, 1]} : vector<8x34xf32> to vector<8x32xf32>
    %cst_15 = arith.constant dense<0.000000e+00> : vector<16x32xf32>
    %30 = tpu.matmul %28, %29, %cst_15 {dimension_numbers = #tpu.dot_dimension_numbers<[1], [0], [0], [1], [0, 0, 1, 1], [], []>} : vector<16x8xf32>, vector<8x32xf32>, vector<16x32xf32> -> vector<16x32xf32>
    %31 = arith.addf %26, %30 : vector<16x32xf32>
    %c0_16 = arith.constant 0 : index
    %c0_17 = arith.constant 0 : index
    %c0_18 = arith.constant 0 : index
    %32 = vector.load %arg6[%c0_16, %c0_17, %c0_18] : memref<1x16x32xf32, #tpu.memory_space<vmem>>, vector<1x16x32xf32>
    %33 = vector.shape_cast %32 : vector<1x16x32xf32> to vector<16x32xf32>
    %34 = vector.shape_cast %31 : vector<16x32xf32> to vector<1x16x32xf32>
    tpu.vector_store %arg6[%c0_16, %c0_17, %c0_18], %34 {strides = array<i32>} : memref<1x16x32xf32, #tpu.memory_space<vmem>>, vector<1x16x32xf32>,
    return
  }
  func.func @transform_0(%arg0: i32, %arg1: i32) -> (i32, i32, i32) {
    %c0_i32 = arith.constant 0 : i32
    %c0_i32_0 = arith.constant 0 : i32
    %c0_i32_1 = arith.constant 0 : i32
    return %arg0, %c0_i32, %c0_i32_0 : i32, i32, i32
  }
  func.func @transform_1(%arg0: i32, %arg1: i32) -> (i32, i32) {
    %c0_i32 = arith.constant 0 : i32
    %c0_i32_0 = arith.constant 0 : i32
    %c0_i32_1 = arith.constant 0 : i32
    return %c0_i32, %c0_i32_0 : i32, i32
  }
  func.func @transform_2(%arg0: i32, %arg1: i32) -> (i32, i32, i32) {
    %c0_i32 = arith.constant 0 : i32
    %c0_i32_0 = arith.constant 0 : i32
    %c0_i32_1 = arith.constant 0 : i32
    %c0_i32_2 = arith.constant 0 : i32
    return %c0_i32, %c0_i32_0, %c0_i32_1 : i32, i32, i32
  }
  func.func @transform_3(%arg0: i32, %arg1: i32) -> (i32, i32) {
    %c0_i32 = arith.constant 0 : i32
    %c0_i32_0 = arith.constant 0 : i32
    %c0_i32_1 = arith.constant 0 : i32
    return %c0_i32, %c0_i32_0 : i32, i32
  }
  func.func @transform_4(%arg0: i32, %arg1: i32) -> (i32, i32, i32) {
    %c0_i32 = arith.constant 0 : i32
    %c0_i32_0 = arith.constant 0 : i32
    return %arg0, %c0_i32, %arg1 : i32, i32, i32
  }
}

</mosaic_0001>

<llo_original>
// kernel: tpu_custom_call.1
$region0: #{tpu_custom_call.1}
  #allocation0 [shape = 'u32[]', space=smem, size = 0x4, offset = 0x4, fixed_abs, tag = 'smem constant byte address 0x4 - core index']
  #allocation1 [shape = 'u32[144,128]{1,0:T(1,128)}', space=vmem, size = 0x12000, scoped, tag = 'internal scratch']
  %s0 = inlined_call_operand.vmem [shape: f32[1,8,16], index: 0, kind: input, shape index: {}]
  %s1 = inlined_call_operand.vmem [shape: f32[16,34], index: 1, kind: input, shape index: {}]
  %s2 = inlined_call_operand.vmem [shape: f32[3,16,8], index: 2, kind: input, shape index: {}]
  %s3 = inlined_call_operand.vmem [shape: f32[16,1], index: 3, kind: input, shape index: {}]
  %s4 = inlined_call_operand.hbm [shape: f32[1,16,32], index: 4, kind: output, shape index: {}]
  %s5 = sld [smem:[#allocation0]]
  $region26: #{tpu_custom_call.1} parent=0
    _
  %s7 = ssub.s32 1, %s5
  %s8 = scalar_select 0, %s7, %s5
  $region1: #{tpu_custom_call.1} parent=0
    #allocation2 [shape = 'u8[8192]{0}', space=vmem, size = 0x2000, scoped, tag = 'output window, operand 0, single buffered']
    #allocation3 [shape = 's32[1]{0}', space=sflag, size = 0x4, scoped, tag = 'scoped memory for tpu_custom_call.1']
    %9 = vsyncpa [#allocation3], 0
    // Predicated region
    $region2: #{tpu_custom_call.1} parent=1 // pred_check
      _
    $region3: #{tpu_custom_call.1} parent=1 // pred_check_branch
      %11 = sbr.rel (0) target = $region5
    $region4: #{tpu_custom_call.1} parent=1 // pred_region
      _
    $region5: #{tpu_custom_call.1} parent=1 // pred_fallthru
      _
    // Predicated region
    $region6: #{tpu_custom_call.1} parent=1 // pred_check
      _
    $region7: #{tpu_custom_call.1} parent=1 // pred_check_branch
      %13 = sbr.rel (0) target = $region9
    $region8: #{tpu_custom_call.1} parent=1 // pred_region
      _
    $region9: #{tpu_custom_call.1} parent=1 // pred_fallthru
      _
    // Predicated region
    $region10: #{tpu_custom_call.1} parent=1 // pred_check
      _
    $region11: #{tpu_custom_call.1} parent=1 // pred_check_branch
      %15 = sbr.rel (0) target = $region13
    $region12: #{tpu_custom_call.1} parent=1 // pred_region
      _
    $region13: #{tpu_custom_call.1} parent=1 // pred_fallthru
      _
    // Predicated region
    $region14: #{tpu_custom_call.1} parent=1 // pred_check
      _
    $region15: #{tpu_custom_call.1} parent=1 // pred_check_branch
      %17 = sbr.rel (0) target = $region17
    $region16: #{tpu_custom_call.1} parent=1 // pred_region
      _
    $region17: #{tpu_custom_call.1} parent=1 // pred_fallthru
      _
    %v18 = vld [vmem:[%s0] sm:$0xff]
    %v19 = vld [vmem:[%s1] sm:$0xff]
    %v20 = vld [vmem:[%s1 + $0x8] sm:$0xff]
    %vm21 = vcmask 130048
    %v23 = vsel %vm21, %v18, 0
    %25 = vmatprep.subr.mxu0 0.0
    %26 = vmatpush1.msra.mxu0 0.0
    %27 = vmatprep.subr.mxu0 0.0
    %28 = vmatpush1.msra.mxu0 0.0
    %29 = vmatprep.subr.mxu0 0.0
    %30 = vmatpush1.msra.mxu0 0.0
    %31 = vmatprep.subr.mxu0 0.0
    %32 = vmatpush1.msra.mxu0 0.0
    %33 = vmatprep.subr.mxu0 0.0
    %34 = vmatpush1.msra.mxu0 0.0
    %35 = vmatprep.subr.mxu0 0.0
    %36 = vmatpush1.msra.mxu0 0.0
    %37 = vmatprep.subr.mxu0 0.0
    %38 = vmatpush1.msra.mxu0 0.0
    %39 = vmatprep.subr.mxu0 0.0
    %40 = vmatpush1.msra.mxu0 0.0
    %41 = vmatprep.subr.mxu0 0.0
    %42 = vmatpush1.msra.mxu0 0.0
    %43 = vmatprep.subr.mxu0 0.0
    %44 = vmatpush1.msra.mxu0 0.0
    %45 = vmatprep.subr.mxu0 0.0
    %46 = vmatpush1.msra.mxu0 0.0
    %47 = vmatprep.subr.mxu0 0.0
    %48 = vmatpush1.msra.mxu0 0.0
    %49 = vmatprep.subr.mxu0 0.0
    %50 = vmatpush1.msra.mxu0 0.0
    %51 = vmatprep.subr.mxu0 0.0
    %52 = vmatpush1.msra.mxu0 0.0
    %53 = vmatprep.subr.mxu0 0.0
    %54 = vmatpush1.msra.mxu0 %v20
    %55 = vmatprep.subr.mxu0 0.0
    %56 = vmatpush1.msra.mxu0 %v19
    %57 = vmatprep.subr.mxu0 0.0
    %58 = vmatpush2.msra.mxu0 0.0
    %59 = vmatprep.subr.mxu0 0.0
    %60 = vmatpush2.msra.mxu0 0.0
    %61 = vmatprep.subr.mxu0 0.0
    %62 = vmatpush2.msra.mxu0 0.0
    %63 = vmatprep.subr.mxu0 0.0
    %64 = vmatpush2.msra.mxu0 0.0
    %65 = vmatprep.subr.mxu0 0.0
    %66 = vmatpush2.msra.mxu0 0.0
    %67 = vmatprep.subr.mxu0 0.0
    %68 = vmatpush2.msra.mxu0 0.0
    %69 = vmatprep.subr.mxu0 0.0
    %70 = vmatpush2.msra.mxu0 0.0
    %71 = vmatprep.subr.mxu0 0.0
    %72 = vmatpush2.msra.mxu0 0.0
    %73 = vmatprep.subr.mxu0 0.0
    %74 = vmatpush2.msra.mxu0 0.0
    %75 = vmatprep.subr.mxu0 0.0
    %76 = vmatpush2.msra.mxu0 0.0
    %77 = vmatprep.subr.mxu0 0.0
    %78 = vmatpush2.msra.mxu0 0.0
    %79 = vmatprep.subr.mxu0 0.0
    %80 = vmatpush2.msra.mxu0 0.0
    %81 = vmatprep.subr.mxu0 0.0
    %82 = vmatpush2.msra.mxu0 0.0
    %83 = vmatprep.subr.mxu0 0.0
    %84 = vmatpush2.msra.mxu0 0.0
    %85 = vmatprep.subr.mxu0 0.0
    %86 = vmatpush2.msra.mxu0 0.0
    %87 = vmatprep.subr.mxu0 0.0
    %88 = vmatpush2.msra.mxu0 0.0
    %89 = vmatprep.mubr.f32.mxu0 0.0
    %90 = vmatmul.mubr.f32.gmra.mxu0 %v23
    %v91 = vpop.f32.mrf.mxu0
    %v92 = vadd.f32 0.0, %v91
    %v93 = vpop.f32.mrf.mxu0
    %94 = vdwg.mxu0
    %s95 = smul.u32 0, 32
    %s96 = sadd.s32 %s95, 1
    %v97 = vlaneseq
    %v98 = vand.u32 %v97, 127
    %v99 = vstv %s96
    %v100 = vadd.s32 %v99, %v98
    %v101 = vld [vmem:[%s3] sm:$0xff]
    %v102 = vld [vmem:[%s3 + $0x8] sm:$0xff]
    %vm103 = vcmp.lt.s32.totalorder %v100, 33
    %v104 = vsel %vm103, 1, 0
    %v105 = vcvt.s32.f32 %v104
    %107 = vset.pattern.permute.xlu0 0
    %108 = vperm.xlu0 %107, %v101
    %v109 = vpop.permute.xlu0 %108
    %112 = vset.pattern.permute.xlu0 0
    %113 = vperm.xlu0 %112, %v102
    %v114 = vpop.permute.xlu0 %113
    %v116 = vmul.f32 %v109, %v105
    %v117 = vmul.f32 %v114, %v105
    %v118 = vld [vmem:[%s2] sm:$0xff]
    %v119 = vld [vmem:[%s2 + $0x8] sm:$0xff]
    %121 = vrot.lane.b32.xlu0 %v92, 126
    %v122 = vpop.permute.xlu0 %121
    %vm124 = vcmask 64512
    %v126 = vsel %vm124, %v118, 0
    %v129 = vsel %vm124, %v119, 0
    %131 = vmatprep.subr.mxu0 0.0
    %132 = vmatpush1.msra.mxu0 0.0
    %133 = vmatprep.subr.mxu0 0.0
    %134 = vmatpush1.msra.mxu0 0.0
    %135 = vmatprep.subr.mxu0 0.0
    %136 = vmatpush1.msra.mxu0 0.0
    %137 = vmatprep.subr.mxu0 0.0
    %138 = vmatpush1.msra.mxu0 0.0
    %139 = vmatprep.subr.mxu0 0.0
    %140 = vmatpush1.msra.mxu0 0.0
    %141 = vmatprep.subr.mxu0 0.0
    %142 = vmatpush1.msra.mxu0 0.0
    %143 = vmatprep.subr.mxu0 0.0
    %144 = vmatpush1.msra.mxu0 0.0
    %145 = vmatprep.subr.mxu0 0.0
    %146 = vmatpush1.msra.mxu0 0.0
    %147 = vmatprep.subr.mxu0 0.0
    %148 = vmatpush1.msra.mxu0 0.0
    %149 = vmatprep.subr.mxu0 0.0
    %150 = vmatpush1.msra.mxu0 0.0
    %151 = vmatprep.subr.mxu0 0.0
    %152 = vmatpush1.msra.mxu0 0.0
    %153 = vmatprep.subr.mxu0 0.0
    %154 = vmatpush1.msra.mxu0 0.0
    %155 = vmatprep.subr.mxu0 0.0
    %156 = vmatpush1.msra.mxu0 0.0
    %157 = vmatprep.subr.mxu0 0.0
    %158 = vmatpush1.msra.mxu0 0.0
    %159 = vmatprep.subr.mxu0 0.0
    %160 = vmatpush1.msra.mxu0 0.0
    %161 = vmatprep.subr.mxu0 0.0
    %162 = vmatpush1.msra.mxu0 %v122
    %163 = vmatprep.subr.mxu0 0.0
    %164 = vmatpush2.msra.mxu0 0.0
    %165 = vmatprep.subr.mxu0 0.0
    %166 = vmatpush2.msra.mxu0 0.0
    %167 = vmatprep.subr.mxu0 0.0
    %168 = vmatpush2.msra.mxu0 0.0
    %169 = vmatprep.subr.mxu0 0.0
    %170 = vmatpush2.msra.mxu0 0.0
    %171 = vmatprep.subr.mxu0 0.0
    %172 = vmatpush2.msra.mxu0 0.0
    %173 = vmatprep.subr.mxu0 0.0
    %174 = vmatpush2.msra.mxu0 0.0
    %175 = vmatprep.subr.mxu0 0.0
    %176 = vmatpush2.msra.mxu0 0.0
    %177 = vmatprep.subr.mxu0 0.0
    %178 = vmatpush2.msra.mxu0 0.0
    %179 = vmatprep.subr.mxu0 0.0
    %180 = vmatpush2.msra.mxu0 0.0
    %181 = vmatprep.subr.mxu0 0.0
    %182 = vmatpush2.msra.mxu0 0.0
    %183 = vmatprep.subr.mxu0 0.0
    %184 = vmatpush2.msra.mxu0 0.0
    %185 = vmatprep.subr.mxu0 0.0
    %186 = vmatpush2.msra.mxu0 0.0
    %187 = vmatprep.subr.mxu0 0.0
    %188 = vmatpush2.msra.mxu0 0.0
    %189 = vmatprep.subr.mxu0 0.0
    %190 = vmatpush2.msra.mxu0 0.0
    %191 = vmatprep.subr.mxu0 0.0
    %192 = vmatpush2.msra.mxu0 0.0
    %193 = vmatprep.subr.mxu0 0.0
    %194 = vmatpush2.msra.mxu0 0.0
    %195 = vmatprep.mubr.f32.mxu0 0.0
    %196 = vmatmul.mubr.f32.gmra.mxu0 %v126
    %v197 = vpop.f32.mrf.mxu0
    %v198 = vadd.f32 0.0, %v197
    %v199 = vpop.f32.mrf.mxu0
    %200 = vmatprep.mubr.f32.mxu0 0.0
    %201 = vmatmul.mubr.f32.gmra.mxu0 %v129
    %v202 = vpop.f32.mrf.mxu0
    %v203 = vadd.f32 0.0, %v202
    %v204 = vpop.f32.mrf.mxu0
    %205 = vdwg.mxu0
    %v206 = vadd.f32 %v116, %v198
    %v207 = vadd.f32 %v117, %v203
    %s208 = scalar_lea.vmem %s2, 16
    %v209 = vld [vmem:[%s208] sm:$0xff]
    %v210 = vld [vmem:[%s208 + $0x8] sm:$0xff]
    %211 = vrot.lane.b32.xlu0 %v92, 127
    %v212 = vpop.permute.xlu0 %211
    %v215 = vsel %vm124, %v209, 0
    %v218 = vsel %vm124, %v210, 0
    %220 = vmatprep.subr.mxu0 0.0
    %221 = vmatpush1.msra.mxu0 0.0
    %222 = vmatprep.subr.mxu0 0.0
    %223 = vmatpush1.msra.mxu0 0.0
    %224 = vmatprep.subr.mxu0 0.0
    %225 = vmatpush1.msra.mxu0 0.0
    %226 = vmatprep.subr.mxu0 0.0
    %227 = vmatpush1.msra.mxu0 0.0
    %228 = vmatprep.subr.mxu0 0.0
    %229 = vmatpush1.msra.mxu0 0.0
    %230 = vmatprep.subr.mxu0 0.0
    %231 = vmatpush1.msra.mxu0 0.0
    %232 = vmatprep.subr.mxu0 0.0
    %233 = vmatpush1.msra.mxu0 0.0
    %234 = vmatprep.subr.mxu0 0.0
    %235 = vmatpush1.msra.mxu0 0.0
    %236 = vmatprep.subr.mxu0 0.0
    %237 = vmatpush1.msra.mxu0 0.0
    %238 = vmatprep.subr.mxu0 0.0
    %239 = vmatpush1.msra.mxu0 0.0
    %240 = vmatprep.subr.mxu0 0.0
    %241 = vmatpush1.msra.mxu0 0.0
    %242 = vmatprep.subr.mxu0 0.0
    %243 = vmatpush1.msra.mxu0 0.0
    %244 = vmatprep.subr.mxu0 0.0
    %245 = vmatpush1.msra.mxu0 0.0
    %246 = vmatprep.subr.mxu0 0.0
    %247 = vmatpush1.msra.mxu0 0.0
    %248 = vmatprep.subr.mxu0 0.0
    %249 = vmatpush1.msra.mxu0 0.0
    %250 = vmatprep.subr.mxu0 0.0
    %251 = vmatpush1.msra.mxu0 %v212
    %252 = vmatprep.subr.mxu0 0.0
    %253 = vmatpush2.msra.mxu0 0.0
    %254 = vmatprep.subr.mxu0 0.0
    %255 = vmatpush2.msra.mxu0 0.0
    %256 = vmatprep.subr.mxu0 0.0
    %257 = vmatpush2.msra.mxu0 0.0
    %258 = vmatprep.subr.mxu0 0.0
    %259 = vmatpush2.msra.mxu0 0.0
    %260 = vmatprep.subr.mxu0 0.0
    %261 = vmatpush2.msra.mxu0 0.0
    %262 = vmatprep.subr.mxu0 0.0
    %263 = vmatpush2.msra.mxu0 0.0
    %264 = vmatprep.subr.mxu0 0.0
    %265 = vmatpush2.msra.mxu0 0.0
    %266 = vmatprep.subr.mxu0 0.0
    %267 = vmatpush2.msra.mxu0 0.0
    %268 = vmatprep.subr.mxu0 0.0
    %269 = vmatpush2.msra.mxu0 0.0
    %270 = vmatprep.subr.mxu0 0.0
    %271 = vmatpush2.msra.mxu0 0.0
    %272 = vmatprep.subr.mxu0 0.0
    %273 = vmatpush2.msra.mxu0 0.0
    %274 = vmatprep.subr.mxu0 0.0
    %275 = vmatpush2.msra.mxu0 0.0
    %276 = vmatprep.subr.mxu0 0.0
    %277 = vmatpush2.msra.mxu0 0.0
    %278 = vmatprep.subr.mxu0 0.0
    %279 = vmatpush2.msra.mxu0 0.0
    %280 = vmatprep.subr.mxu0 0.0
    %281 = vmatpush2.msra.mxu0 0.0
    %282 = vmatprep.subr.mxu0 0.0
    %283 = vmatpush2.msra.mxu0 0.0
    %284 = vmatprep.mubr.f32.mxu0 0.0
    %285 = vmatmul.mubr.f32.gmra.mxu0 %v215
    %v286 = vpop.f32.mrf.mxu0
    %v287 = vadd.f32 0.0, %v286
    %v288 = vpop.f32.mrf.mxu0
    %289 = vmatprep.mubr.f32.mxu0 0.0
    %290 = vmatmul.mubr.f32.gmra.mxu0 %v218
    %v291 = vpop.f32.mrf.mxu0
    %v292 = vadd.f32 0.0, %v291
    %v293 = vpop.f32.mrf.mxu0
    %294 = vdwg.mxu0
    %v295 = vadd.f32 %v206, %v287
    %v296 = vadd.f32 %v207, %v292
    %s297 = scalar_lea.vmem %s2, 32
    %v298 = vld [vmem:[%s297] sm:$0xff]
    %v299 = vld [vmem:[%s297 + $0x8] sm:$0xff]
    %v301 = vsel %vm124, %v298, 0
    %v304 = vsel %vm124, %v299, 0
    %306 = vmatprep.subr.mxu0 0.0
    %307 = vmatpush1.msra.mxu0 0.0
    %308 = vmatprep.subr.mxu0 0.0
    %309 = vmatpush1.msra.mxu0 0.0
    %310 = vmatprep.subr.mxu0 0.0
    %311 = vmatpush1.msra.mxu0 0.0
    %312 = vmatprep.subr.mxu0 0.0
    %313 = vmatpush1.msra.mxu0 0.0
    %314 = vmatprep.subr.mxu0 0.0
    %315 = vmatpush1.msra.mxu0 0.0
    %316 = vmatprep.subr.mxu0 0.0
    %317 = vmatpush1.msra.mxu0 0.0
    %318 = vmatprep.subr.mxu0 0.0
    %319 = vmatpush1.msra.mxu0 0.0
    %320 = vmatprep.subr.mxu0 0.0
    %321 = vmatpush1.msra.mxu0 0.0
    %322 = vmatprep.subr.mxu0 0.0
    %323 = vmatpush1.msra.mxu0 0.0
    %324 = vmatprep.subr.mxu0 0.0
    %325 = vmatpush1.msra.mxu0 0.0
    %326 = vmatprep.subr.mxu0 0.0
    %327 = vmatpush1.msra.mxu0 0.0
    %328 = vmatprep.subr.mxu0 0.0
    %329 = vmatpush1.msra.mxu0 0.0
    %330 = vmatprep.subr.mxu0 0.0
    %331 = vmatpush1.msra.mxu0 0.0
    %332 = vmatprep.subr.mxu0 0.0
    %333 = vmatpush1.msra.mxu0 0.0
    %334 = vmatprep.subr.mxu0 0.0
    %335 = vmatpush1.msra.mxu0 0.0
    %336 = vmatprep.subr.mxu0 0.0
    %337 = vmatpush1.msra.mxu0 %v92
    %338 = vmatprep.subr.mxu0 0.0
    %339 = vmatpush2.msra.mxu0 0.0
    %340 = vmatprep.subr.mxu0 0.0
    %341 = vmatpush2.msra.mxu0 0.0
    %342 = vmatprep.subr.mxu0 0.0
    %343 = vmatpush2.msra.mxu0 0.0
    %344 = vmatprep.subr.mxu0 0.0
    %345 = vmatpush2.msra.mxu0 0.0
    %346 = vmatprep.subr.mxu0 0.0
    %347 = vmatpush2.msra.mxu0 0.0
    %348 = vmatprep.subr.mxu0 0.0
    %349 = vmatpush2.msra.mxu0 0.0
    %350 = vmatprep.subr.mxu0 0.0
    %351 = vmatpush2.msra.mxu0 0.0
    %352 = vmatprep.subr.mxu0 0.0
    %353 = vmatpush2.msra.mxu0 0.0
    %354 = vmatprep.subr.mxu0 0.0
    %355 = vmatpush2.msra.mxu0 0.0
    %356 = vmatprep.subr.mxu0 0.0
    %357 = vmatpush2.msra.mxu0 0.0
    %358 = vmatprep.subr.mxu0 0.0
    %359 = vmatpush2.msra.mxu0 0.0
    %360 = vmatprep.subr.mxu0 0.0
    %361 = vmatpush2.msra.mxu0 0.0
    %362 = vmatprep.subr.mxu0 0.0
    %363 = vmatpush2.msra.mxu0 0.0
    %364 = vmatprep.subr.mxu0 0.0
    %365 = vmatpush2.msra.mxu0 0.0
    %366 = vmatprep.subr.mxu0 0.0
    %367 = vmatpush2.msra.mxu0 0.0
    %368 = vmatprep.subr.mxu0 0.0
    %369 = vmatpush2.msra.mxu0 0.0
    %370 = vmatprep.mubr.f32.mxu0 0.0
    %371 = vmatmul.mubr.f32.gmra.mxu0 %v301
    %v372 = vpop.f32.mrf.mxu0
    %v373 = vadd.f32 0.0, %v372
    %v374 = vpop.f32.mrf.mxu0
    %375 = vmatprep.mubr.f32.mxu0 0.0
    %376 = vmatmul.mubr.f32.gmra.mxu0 %v304
    %v377 = vpop.f32.mrf.mxu0
    %v378 = vadd.f32 0.0, %v377
    %v379 = vpop.f32.mrf.mxu0
    %380 = vdwg.mxu0
    %v381 = vadd.f32 %v295, %v373
    %v382 = vadd.f32 %v296, %v378
    %vm383 = vcmask 261120
    %384 = vst.msk [vmem:[#allocation2] sm:$0xff] %vm383, %v381
    %385 = vst.msk [vmem:[#allocation2 + $0x8] sm:$0xff] %vm383, %v382
    // Predicated region
    $region18: #{tpu_custom_call.1} parent=1 // pred_check
      _
    $region19: #{tpu_custom_call.1} parent=1 // pred_check_branch
      %387 = sbr.rel (0) target = $region21
    $region20: #{tpu_custom_call.1} parent=1 // pred_region
      %s389 = ssub.s32 256, 256
      %390 = vsyncadd [#allocation3], %s389
      %s391 = sshll.u32 [#allocation2], 4
      %s392 = int_to_ptr.vmem [resolvable:$true] %s391
      %397 = dma.vmem_to_hbm [thread:$0]  %s392, 256, %s4, [#allocation3], 128, 128, 8
    $region21: #{tpu_custom_call.1} parent=1 // pred_fallthru
      _
    // Predicated region
    $region22: #{tpu_custom_call.1} parent=1 // pred_check
      _
    $region23: #{tpu_custom_call.1} parent=1 // pred_check_branch
      %399 = sbr.rel (0) target = $region25
    $region24: #{tpu_custom_call.1} parent=1 // pred_region
      %400 = dma.done [#allocation3], 256
    $region25: #{tpu_custom_call.1} parent=1 // pred_fallthru
      _
    %401 = vsyncpa [#allocation3], 1

</llo_original>
